<compile_context>
chip_gen: v6e
topology: v6e:2x2x1
jax: 0.10.0
libtpu: 0.0.40
codegen_flags: <defaults>
</compile_context>

<pallas_src>
import functools

import jax
import jax.numpy as jnp
from jax import lax
from jax.experimental import pallas as pl
from jax.experimental.pallas import tpu as pltpu


LANES = 128                 # vreg lane width (fast axis)
SUBLANES = 8                # vreg sublane count (f32)
CHUNK = LANES * SUBLANES    # pad granularity -> rows is always a multiple of 8
NCORES = 2                  # leading "parallel" grid axis (v7x megacore split)


def _tile_config():
    """Per-generation tile sizing (rows per block, buffers, VMEM limit)."""
    try:
        kind = jax.devices()[0].device_kind.lower()
    except Exception:  # pragma: no cover - defensive
        kind = ""
    if "v2" in kind or "v3" in kind:
        # Old 16 MiB-VMEM generations: stay conservative (1 MiB tiles).
        return 2048, 3, 12 * 1024 * 1024
    # v5e / v6e / v7x: 8 MiB f32 tile, 3 buffers = 24 MiB, 40 MiB scoped VMEM
    # (fits v7x's 64 MiB physical per-core VMEM with headroom; raises the
    #  16 MiB v5e scoped default explicitly).
    return 16384, 3, 40 * 1024 * 1024


BLOCK_ROWS, N_BUFFERS, VMEM_LIMIT_BYTES = _tile_config()


# ----------------------------- Pallas kernels ------------------------------ #

def _single_block_sum_kernel(x_ref, o_ref):
    """Whole (rows, 128) array resident in VMEM; one reduce to (1, 1)."""
    x = x_ref[...].astype(jnp.float32)
    o_ref[...] = jnp.sum(x, axis=(0, 1), keepdims=True)


def _tiled_sum_kernel(x_ref, o_ref, acc_ref, *, total_rows, block_rows,
                      steps_per_core, even):
    """Stream (block_rows, 128) tiles into a (1, 128) per-core accumulator.

    Grid is (NCORES, steps_per_core): the leading axis is 'parallel' (megacore
    split on v7x), the trailing axis is the sequential reduction over row
    blocks handled by each core.
    """
    c = pl.program_id(0)
    i = pl.program_id(1)

    @pl.when(i == 0)
    def _():
        acc_ref[...] = jnp.zeros_like(acc_ref)

    x = x_ref[...].astype(jnp.float32)                      # (block_rows, 128)

    if even:
        # Row count divides evenly into (NCORES * steps_per_core) full blocks:
        # no mask code emitted at all.
        acc_ref[...] += jnp.sum(x, axis=0, keepdims=True)
    else:
        # Scalar-unit arithmetic only; the mask itself is gated to the single
        # partial (or phantom) block so interior steps stay pure VPU adds.
        row_start = (c * steps_per_core + i) * block_rows
        is_full = row_start + block_rows <= total_rows

        @pl.when(is_full)
        def _():
            acc_ref[...] += jnp.sum(x, axis=0, keepdims=True)

        @pl.when(jnp.logical_not(is_full))
        def _():
            # Valid rows in this block (<= 0 for phantom blocks past the end,
            # which then contribute exactly zero).
            valid = total_rows - row_start
            row_ids = lax.broadcasted_iota(jnp.int32, x.shape, 0)
            xm = jnp.where(row_ids < valid, x, jnp.float32(0.0))
            acc_ref[...] += jnp.sum(xm, axis=0, keepdims=True)

    @pl.when(i == pl.num_programs(1) - 1)
    def _():
        # Each core owns a full, tile-aligned (8, 128) output block: row 0
        # holds its lane-wise partial sums, rows 1..7 are zero.
        o_ref[...] = jnp.zeros_like(o_ref)
        o_ref[0:1, :] = acc_ref[...]


# ------------------------------ Host wrapper ------------------------------- #

@jax.jit
def pallas_sum(persample_loss: jax.Array) -> jax.Array:
    """loss = sum(persample_loss) via a Pallas TPU reduction kernel."""
    x = persample_loss.reshape(-1)
    n = x.shape[0]
    if n == 0:
        return jnp.float32(0.0)

    # Minimal zero-pad (in the input dtype) to a multiple of 1024 so the
    # (rows, 128) reshape is valid and rows % 8 == 0; skipped for aligned
    # sizes.  No HBM-side dtype cast: bf16 inputs stream as bf16.
    n_pad = ((n + CHUNK - 1) // CHUNK) * CHUNK
    if n_pad != n:
        x = jnp.pad(x, (0, n_pad - n))
    rows = n_pad // LANES
    x2d = x.reshape(rows, LANES)

    if rows <= BLOCK_ROWS:
        # Tiny / mid-size input (the common case for a per-sample loss
        # vector): one block, no grid, no pipeline overhead.
        out = pl.pallas_call(
            _single_block_sum_kernel,
            out_shape=jax.ShapeDtypeStruct((1, 1), jnp.float32),
            compiler_params=pltpu.CompilerParams(
                vmem_limit_bytes=VMEM_LIMIT_BYTES),
        )(x2d)
        return out[0, 0]

    # ---- tiled streaming reduction ---- #
    nb = (rows + BLOCK_ROWS - 1) // BLOCK_ROWS            # valid row blocks
    steps_per_core = (nb + NCORES - 1) // NCORES
    even = (rows % BLOCK_ROWS == 0) and (nb % NCORES == 0)

    def x_index_map(c, i):
        blk = c * steps_per_core + i
        # Phantom steps (past the last valid block) re-read the last block;
        # the kernel masks their contribution to exactly zero.
        return (jnp.minimum(blk, nb - 1), 0)

    in_spec_kwargs = {}
    if hasattr(pl, "Buffered"):
        in_spec_kwargs["pipeline_mode"] = pl.Buffered(N_BUFFERS)

    kernel = functools.partial(
        _tiled_sum_kernel,
        total_rows=rows, block_rows=BLOCK_ROWS,
        steps_per_core=steps_per_core, even=even)

    out = pl.pallas_call(
        kernel,
        out_shape=jax.ShapeDtypeStruct((NCORES * SUBLANES, LANES),
                                       jnp.float32),
        grid_spec=pltpu.PrefetchScalarGridSpec(
            num_scalar_prefetch=0,
            grid=(NCORES, steps_per_core),
            in_specs=[pl.BlockSpec((BLOCK_ROWS, LANES), x_index_map,
                                   **in_spec_kwargs)],
            out_specs=pl.BlockSpec((SUBLANES, LANES), lambda c, i: (c, 0)),
            scratch_shapes=[pltpu.VMEM((1, LANES), jnp.float32)],
        ),
        compiler_params=pltpu.CompilerParams(
            dimension_semantics=("parallel", "arbitrary"),
            vmem_limit_bytes=VMEM_LIMIT_BYTES,
        ),
    )(x2d)

    # Combine the per-core lane partials (rows 1..7 of each block are zero).
    return jnp.sum(out)


# --------------------------- Module-level wrapper --------------------------- #

class FlowODECalcDensity:
    """JAX/Pallas port of the criterion's forward pass.

    The module has no learnable parameters (its __init__ only stores config
    strings/ints), so there are no weights to initialize.
    """

    def __init__(self, result_save_dir="flow_ode_res_save_dir",
                 density_calc_z_offset=0):
        self.result_save_dir = result_save_dir
        self.density_calc_z_offset = density_calc_z_offset

    def forward(self, persample_loss, training=True):
        if training:
            # DiffusionLoss.forward: loss = torch.sum(persample_loss)
            return pallas_sum(persample_loss)
        else:
            # TODO(synk): eval path pickles (sid, atoms, tags, pred_pos) to a
            # file on disk; host file I/O / pickle has no Pallas equivalent.
            return jnp.float32(0.0)


# ---------------------------------- main ------------------------------------ #

if __name__ == "__main__":
    key = jax.random.PRNGKey(0)
    k1, k2, k3 = jax.random.split(key, 3)
    criterion = FlowODECalcDensity()

    # 1) Typical criterion input: small per-sample loss vector (batch = 8).
    #    Exercises the single-block fast path.
    small = jax.random.normal(k1, (8,), dtype=jnp.float32)
    loss_small = jax.block_until_ready(criterion.forward(small, training=True))
    ref_small = jnp.sum(small)
    assert jnp.allclose(loss_small, ref_small, rtol=1e-5, atol=1e-5), (
        loss_small, ref_small)

    # 1b) bf16 passthrough: no wrapper-side cast, kernel upcasts on load.
    small_bf16 = jax.random.normal(k3, (8,), dtype=jnp.bfloat16)
    loss_bf16 = jax.block_until_ready(
        criterion.forward(small_bf16, training=True))
    ref_bf16 = jnp.sum(small_bf16.astype(jnp.float32))
    assert jnp.allclose(loss_bf16, ref_bf16, rtol=1e-2, atol=1e-2), (
        loss_bf16, ref_bf16)

    # 2) Larger, non-aligned batch to exercise the tiled reduction path:
    #    2-way parallel split, gated ragged-tail masking, phantom-block clamp.
    n_big = 2 * BLOCK_ROWS * LANES + 5000
    big = jax.random.normal(k2, (n_big,), dtype=jnp.float32)
    loss_big = jax.block_until_ready(pallas_sum(big))
    ref_big = jnp.sum(big)
    assert jnp.allclose(loss_big, ref_big, rtol=1e-3, atol=2.0), (
        loss_big, ref_big)

    # 3) Eval path returns 0.0 (file dump skipped).
    zero = jax.block_until_ready(criterion.forward(small, training=False))
    assert float(zero) == 0.0

    print("KERNEL_OK")
</pallas_src>

<mosaic_0001>
module attributes {stable_mosaic.version = 11 : i64} {
  func.func @_single_block_sum_kernel(%arg0: memref<8x128xf32, #tpu.memory_space<vmem>>, %arg1: memref<1x1xf32, #tpu.memory_space<vmem>>) attributes {dimension_semantics = [], scalar_prefetch = 0 : i64, scratch_operands = 0 : i64, tpu.core_type = #tpu.core_type<tc>} {
    %c0 = arith.constant 0 : index
    %c0_0 = arith.constant 0 : index
    %0 = vector.load %arg0[%c0, %c0_0] : memref<8x128xf32, #tpu.memory_space<vmem>>, vector<8x128xf32>
    %1 = vector.shape_cast %0 : vector<8x128xf32> to vector<1x8x128xf32>
    %cst = arith.constant dense<0.000000e+00> : vector<1xf32>
    %2 = vector.multi_reduction <add>, %1, %cst [1, 2] : vector<1x8x128xf32> to vector<1xf32>
    %3 = vector.shape_cast %2 : vector<1xf32> to vector<1x1x1xf32>
    %4 = vector.extract %3[0, 0, 0] : f32 from vector<1x1x1xf32>
    %5 = vector.broadcast %4 : f32 to vector<1x1xf32>
    %c0_1 = arith.constant 0 : index
    %c0_2 = arith.constant 0 : index
    %6 = vector.load %arg1[%c0_1, %c0_2] : memref<1x1xf32, #tpu.memory_space<vmem>>, vector<1x1xf32>
    tpu.vector_store %arg1[%c0_1, %c0_2], %5 {strides = array<i32>} : memref<1x1xf32, #tpu.memory_space<vmem>>, vector<1x1xf32>,
    return
  }
}

</mosaic_0001>

<llo_original>
// kernel: pallas_sum.1
$region0: #{pallas_sum.1}
  #allocation0 [shape = 'u32[]', space=smem, size = 0x4, offset = 0x4, fixed_abs, tag = 'smem constant byte address 0x4 - core index']
  #allocation1 [shape = 'u32[144,128]{1,0:T(1,128)}', space=vmem, size = 0x12000, scoped, tag = 'internal scratch']
  %s0 = inlined_call_operand.vmem [shape: f32[8,128], index: 0, kind: input, shape index: {}]
  %s1 = inlined_call_operand.hbm [shape: f32[1,1], index: 1, kind: output, shape index: {}]
  %s2 = sld [smem:[#allocation0]]
  $region14: #{pallas_sum.1} parent=0
    _
  %s4 = ssub.s32 1, %s2
  %s5 = scalar_select 0, %s4, %s2
  $region1: #{pallas_sum.1} parent=0
    #allocation2 [shape = 'u8[512]{0}', space=vmem, size = 0x400, scoped, tag = 'output window, operand 0, single buffered']
    #allocation3 [shape = 's32[1]{0}', space=sflag, size = 0x4, scoped, tag = 'scoped memory for pallas_sum.1']
    %6 = vsyncpa [#allocation3], 0
    // Predicated region
    $region2: #{pallas_sum.1} parent=1 // pred_check
      _
    $region3: #{pallas_sum.1} parent=1 // pred_check_branch
      %8 = sbr.rel (0) target = $region5
    $region4: #{pallas_sum.1} parent=1 // pred_region
      _
    $region5: #{pallas_sum.1} parent=1 // pred_fallthru
      _
    %v9 = vld [vmem:[%s0] sm:$0xff]
    %10 = vadd.xlane.f32.xlu0 %v9
    %v11 = vpop.xlane.xlu0 %10
    %v12 = vrot.slane %v11, 4
    %v13 = vadd.f32 %v11, %v12
    %v14 = vrot.slane %v13, 2
    %v15 = vadd.f32 %v13, %v14
    %v16 = vrot.slane %v15, 1
    %v17 = vadd.f32 %v15, %v16
    %s18 = vtos %v17
    %v19 = vstv %s18
    %vm20 = vcmask 0
    %21 = vst.msk [vmem:[#allocation2] sm:$0x1] %vm20, %v19
    // Predicated region
    $region6: #{pallas_sum.1} parent=1 // pred_check
      _
    $region7: #{pallas_sum.1} parent=1 // pred_check_branch
      %23 = sbr.rel (0) target = $region9
    $region8: #{pallas_sum.1} parent=1 // pred_region
      %s25 = ssub.s32 16, 16
      %26 = vsyncadd [#allocation3], %s25
      %s28 = sshll.u32 [#allocation2], 4
      %s29 = int_to_ptr.vmem [resolvable:$true] %s28
      %31 = dma.vmem_to_hbm [thread:$0]  %s29, 16, %s1, [#allocation3]
    $region9: #{pallas_sum.1} parent=1 // pred_fallthru
      _
    // Predicated region
    $region10: #{pallas_sum.1} parent=1 // pred_check
      _
    $region11: #{pallas_sum.1} parent=1 // pred_check_branch
      %33 = sbr.rel (0) target = $region13
    $region12: #{pallas_sum.1} parent=1 // pred_region
      %34 = dma.done [#allocation3], 16
    $region13: #{pallas_sum.1} parent=1 // pred_fallthru
      _
    %35 = vsyncpa [#allocation3], 1

</llo_original>
